<compile_context>
chip_gen: v7x
topology: tpu7x:2x2x1
jax: 0.10.0
libtpu: 0.0.40
codegen_flags: <defaults>
</compile_context>

<pallas_src>
import functools

import jax
import jax.numpy as jnp
from jax.experimental import pallas as pl
from jax.experimental.pallas import tpu as pltpu


def _largest_divisor_leq(n: int, cap: int) -> int:
    cap = max(1, min(n, cap))
    for d in range(cap, 0, -1):
        if n % d == 0:
            return d
    return 1


def _subsample_kernel(x_ref, o_ref, tbuf_ref, *, factor: int):
    # x_ref   : (B, Hp, Wp)   B whole spatial planes (fused N*C block)
    # o_ref   : (B, Ho, Wo)
    # tbuf_ref: (Wp, B*Ho)    VMEM scratch: row-subsampled tile with W on the
    #                         sublane axis so the W pick is also a sublane-
    #                         strided load.
    b, _, wp = x_ref.shape
    _, ho, wo = o_ref.shape

    # 1) Row (H) subsample: sublane-strided load straight off the input ref.
    rows = x_ref[:, pl.ds(0, ho, stride=factor), :]            # (B, Ho, Wp)
    rows2d = rows.reshape(b * ho, wp)                          # lane dim unchanged

    # 2) Column (W) subsample: XLU transpose -> scratch -> strided load -> back.
    tbuf_ref[...] = jnp.swapaxes(rows2d, 0, 1)                 # (Wp, B*Ho)
    cols = tbuf_ref[pl.ds(0, wo, stride=factor), :]            # (Wo, B*Ho)
    o_ref[...] = jnp.swapaxes(cols, 0, 1).reshape(b, ho, wo)   # (B, Ho, Wo)


def subsample(x: jax.Array, factor: int = 2, *,
              target_block_bytes: int = 2 << 20) -> jax.Array:
    """Pallas TPU equivalent of PyTorch SubSample.forward: x[:, :, ::factor, ::factor]."""
    if factor == 1:
        return x

    n, c, h, w = x.shape
    ho = -(-h // factor)                  # == len(range(0, h, factor))
    wo = -(-w // factor)
    hp, wp = ho * factor, wo * factor     # pad H/W up to a multiple of `factor`;
    if (hp, wp) != (h, w):                # padded rows/cols are never selected.
        x = jnp.pad(x, ((0, 0), (0, 0), (0, hp - h), (0, wp - w)))

    nc = n * c
    xr = x.reshape(nc, hp, wp)            # fuse N and C (free, row-major)

    itemsize = x.dtype.itemsize
    plane_bytes = hp * wp * itemsize
    # Fuse as many whole (H, W) planes per grid step as fit a ~2 MiB input tile
    # (2x in + 2x out double-buffers + scratch ~= 6 MiB << VMEM on all gens,
    #  including v7x's 64 MiB and v5e's 16 MiB default scoped limit).
    b = _largest_divisor_leq(nc, max(1, target_block_bytes // plane_bytes))
    # v7x has 2 TensorCores: prefer >=2 parallel grid steps when that does not
    # shrink the input tile below ~512 KiB (harmless no-op on v5e / v6e).
    if nc // b < 2 and b % 2 == 0 and (b // 2) * plane_bytes >= (512 << 10):
        b //= 2
    grid = (nc // b,)

    bytes_accessed = nc * (hp * wp + ho * wo) * itemsize

    out = pl.pallas_call(
        functools.partial(_subsample_kernel, factor=factor),
        out_shape=jax.ShapeDtypeStruct((nc, ho, wo), x.dtype),
        grid=grid,
        in_specs=[pl.BlockSpec((b, hp, wp), lambda i: (i, 0, 0))],
        out_specs=pl.BlockSpec((b, ho, wo), lambda i: (i, 0, 0)),
        scratch_shapes=[pltpu.VMEM((wp, b * ho), x.dtype)],
        compiler_params=pltpu.CompilerParams(
            dimension_semantics=("parallel",),
            vmem_limit_bytes=32 * 1024 * 1024,   # actual use ~6 MiB; v7x-safe
        ),
        cost_estimate=pl.CostEstimate(
            flops=0, transcendentals=0, bytes_accessed=bytes_accessed),
    )(xr)

    return out.reshape(n, c, ho, wo)


if __name__ == "__main__":
    key = jax.random.PRNGKey(0)
    n, c, h, w = 2, 4, 16, 16
    factor = 2

    x = jax.random.normal(key, (n, c, h, w), dtype=jnp.float32)

    out = jax.block_until_ready(subsample(x, factor=factor))

    # Reference: exact PyTorch semantics of x[:, :, ::factor, ::factor]
    ref = x[:, :, ::factor, ::factor]
    assert out.shape == ref.shape, (out.shape, ref.shape)
    assert out.dtype == ref.dtype, (out.dtype, ref.dtype)
    assert bool(jnp.all(out == ref)), "mismatch vs strided-slice reference"

    print("KERNEL_OK")
</pallas_src>

<mosaic_0001>
module attributes {stable_mosaic.version = 11 : i64} {
  func.func @_subsample_kernel(%arg0: i32, %arg1: memref<8x16x16xf32, #tpu.memory_space<vmem>>, %arg2: memref<8x8x8xf32, #tpu.memory_space<vmem>>, %arg3: memref<16x64xf32, #tpu.memory_space<vmem>>) attributes {dimension_semantics = [#tpu.dimension_semantics<parallel>], iteration_bounds = array<i64: 1>, scalar_prefetch = 0 : i64, scratch_operands = 1 : i64, tpu.core_type = #tpu.core_type<tc>, window_params = [{transform_indices = @transform_0, window_bounds = array<i64: 8, 16, 16>}, {transform_indices = @transform_1, window_bounds = array<i64: 8, 8, 8>}]} {
    %c0 = arith.constant 0 : index
    %c0_0 = arith.constant 0 : index
    %c0_1 = arith.constant 0 : index
    %0 = tpu.strided_load %arg1[%c0, %c0_0, %c0_1] {strides = array<i32: 1, 2, 1>} : memref<8x16x16xf32, #tpu.memory_space<vmem>>, vector<8x8x16xf32>
    %1 = vector.shape_cast %0 : vector<8x8x16xf32> to vector<64x16xf32>
    %2 = tpu.transpose %1, [1, 0] : vector<64x16xf32> -> vector<16x64xf32>
    %c0_2 = arith.constant 0 : index
    %c0_3 = arith.constant 0 : index
    %3 = vector.load %arg3[%c0_2, %c0_3] : memref<16x64xf32, #tpu.memory_space<vmem>>, vector<16x64xf32>
    tpu.vector_store %arg3[%c0_2, %c0_3], %2 {strides = array<i32>} : memref<16x64xf32, #tpu.memory_space<vmem>>, vector<16x64xf32>,
    %c0_4 = arith.constant 0 : index
    %c0_5 = arith.constant 0 : index
    %4 = tpu.strided_load %arg3[%c0_4, %c0_5] {strides = array<i32: 2, 1>} : memref<16x64xf32, #tpu.memory_space<vmem>>, vector<8x64xf32>
    %5 = tpu.transpose %4, [1, 0] : vector<8x64xf32> -> vector<64x8xf32>
    %6 = vector.shape_cast %5 : vector<64x8xf32> to vector<8x8x8xf32>
    %c0_6 = arith.constant 0 : index
    %c0_7 = arith.constant 0 : index
    %c0_8 = arith.constant 0 : index
    %7 = vector.load %arg2[%c0_6, %c0_7, %c0_8] : memref<8x8x8xf32, #tpu.memory_space<vmem>>, vector<8x8x8xf32>
    tpu.vector_store %arg2[%c0_6, %c0_7, %c0_8], %6 {strides = array<i32>} : memref<8x8x8xf32, #tpu.memory_space<vmem>>, vector<8x8x8xf32>,
    return
  }
  func.func @transform_0(%arg0: i32) -> (i32, i32, i32) {
    %c0_i32 = arith.constant 0 : i32
    %c0_i32_0 = arith.constant 0 : i32
    %c0_i32_1 = arith.constant 0 : i32
    return %arg0, %c0_i32, %c0_i32_0 : i32, i32, i32
  }
  func.func @transform_1(%arg0: i32) -> (i32, i32, i32) {
    %c0_i32 = arith.constant 0 : i32
    %c0_i32_0 = arith.constant 0 : i32
    %c0_i32_1 = arith.constant 0 : i32
    return %arg0, %c0_i32, %c0_i32_0 : i32, i32, i32
  }
}

</mosaic_0001>

<llo_original>
// kernel: tpu_custom_call.1
$region0: #{tpu_custom_call.1}
  #allocation0 [shape = 'u32[]', space=smem, size = 0x4, offset = 0x4, fixed_abs, tag = 'smem constant byte address 0x4 - core index']
  #allocation1 [shape = 'u32[144,128]{1,0:T(1,128)}', space=vmem, size = 0x12000, scoped, tag = 'internal scratch']
  #allocation2 [shape = 'f32[16,64]{1,0:T(8,128)}', space=vmem, size = 0x2000, scoped, tag = 'scratch operand']
  %s0 = inlined_call_operand.hbm [shape: f32[8,16,16], index: 0, kind: input, shape index: {}]
  %s1 = inlined_call_operand.hbm [shape: f32[8,8,8], index: 1, kind: output, shape index: {}]
  %s2 = sld [smem:[#allocation0]]
  $region18: #{tpu_custom_call.1} parent=0
    _
  %s4 = ssub.s32 1, %s2
  %s5 = scalar_select 0, %s4, %s2
  $region1: #{tpu_custom_call.1} parent=0
    #allocation3 [shape = 'u8[65536]{0}', space=vmem, size = 0x10000, scoped, tag = 'input window, operand 0, single buffered']
    #allocation4 [shape = 's32[1]{0}', space=sflag, size = 0x4, scoped, tag = 'scoped memory for tpu_custom_call.1']
    #allocation5 [shape = 's32[1]{0}', space=sflag, size = 0x4, scoped, tag = 'scoped memory for tpu_custom_call.1']
    #allocation6 [shape = 'u8[32768]{0}', space=vmem, size = 0x8000, scoped, tag = 'output window, operand 0, single buffered']
    %6 = vsyncpa [#allocation4], 0
    %7 = vsyncpa [#allocation5], 0
    // Predicated region
    $region2: #{tpu_custom_call.1} parent=1 // pred_check
      _
    $region3: #{tpu_custom_call.1} parent=1 // pred_check_branch
      %9 = sbr.rel (0) target = $region5
    $region4: #{tpu_custom_call.1} parent=1 // pred_region
      %s11 = ssub.s32 2048, 2048
      %12 = vsyncadd [#allocation4], %s11
      %s13 = sshll.u32 [#allocation3], 4
      %s14 = int_to_ptr.vmem [resolvable:$true] %s13
      %19 = dma.hbm_to_vmem [thread:$0]  %s0, 2048, %s14, [#allocation4], 128, 128, 8
    $region5: #{tpu_custom_call.1} parent=1 // pred_fallthru
      _
    // Predicated region
    $region6: #{tpu_custom_call.1} parent=1 // pred_check
      _
    $region7: #{tpu_custom_call.1} parent=1 // pred_check_branch
      %21 = sbr.rel (0) target = $region9
    $region8: #{tpu_custom_call.1} parent=1 // pred_region
      %22 = dma.done [#allocation4], 2048
    $region9: #{tpu_custom_call.1} parent=1 // pred_fallthru
      _
    %v23 = vld [vmem:[#allocation3] ss:$2 sm:$0xff]
    %s24 = scalar_lea.vmem [#allocation3], 16
    %v25 = vld [vmem:[%s24] ss:$2 sm:$0xff]
    %s26 = scalar_lea.vmem [#allocation3], 32
    %v27 = vld [vmem:[%s26] ss:$2 sm:$0xff]
    %s28 = scalar_lea.vmem [#allocation3], 48
    %v29 = vld [vmem:[%s28] ss:$2 sm:$0xff]
    %s30 = scalar_lea.vmem [#allocation3], 64
    %v31 = vld [vmem:[%s30] ss:$2 sm:$0xff]
    %s32 = scalar_lea.vmem [#allocation3], 80
    %v33 = vld [vmem:[%s32] ss:$2 sm:$0xff]
    %s34 = scalar_lea.vmem [#allocation3], 96
    %v35 = vld [vmem:[%s34] ss:$2 sm:$0xff]
    %s36 = scalar_lea.vmem [#allocation3], 112
    %v37 = vld [vmem:[%s36] ss:$2 sm:$0xff]
    %38 = vxpose.xlu0.b32.start [1/16] %v23, 128
    %39 = vxpose.xlu0.b32.cont [2/16] %v25, 128
    %40 = vxpose.xlu0.b32.cont [3/16] %v27, 128
    %41 = vxpose.xlu0.b32.cont [4/16] %v29, 128
    %42 = vxpose.xlu0.b32.cont [5/16] %v31, 128
    %43 = vxpose.xlu0.b32.cont [6/16] %v33, 128
    %44 = vxpose.xlu0.b32.cont [7/16] %v35, 128
    %45 = vxpose.xlu0.b32.cont [8/16] %v37, 128
    %46 = vxpose.xlu0.b32.cont [9/16] 0.0, 128
    %47 = vxpose.xlu0.b32.cont [10/16] 0.0, 128
    %48 = vxpose.xlu0.b32.cont [11/16] 0.0, 128
    %49 = vxpose.xlu0.b32.cont [12/16] 0.0, 128
    %50 = vxpose.xlu0.b32.cont [13/16] 0.0, 128
    %51 = vxpose.xlu0.b32.cont [14/16] 0.0, 128
    %52 = vxpose.xlu0.b32.cont [15/16] 0.0, 128
    %53 = vxpose.xlu0.b32.end [16/16] 0.0, 128
    %v54 = vpop.trf.xlu0
    %v55 = vpop.trf.xlu0
    %v56 = vpop.trf.xlu0
    %v57 = vpop.trf.xlu0
    %v58 = vpop.trf.xlu0
    %v59 = vpop.trf.xlu0
    %v60 = vpop.trf.xlu0
    %v61 = vpop.trf.xlu0
    %v62 = vpop.trf.xlu0
    %v63 = vpop.trf.xlu0
    %v64 = vpop.trf.xlu0
    %v65 = vpop.trf.xlu0
    %v66 = vpop.trf.xlu0
    %v67 = vpop.trf.xlu0
    %v68 = vpop.trf.xlu0
    %v69 = vpop.trf.xlu0
    %vm70 = vcmask 523264
    %71 = vst.msk [vmem:[#allocation2] sm:$0xff] %vm70, %v54
    %72 = vst.msk [vmem:[#allocation2 + $0x8] sm:$0xff] %vm70, %v55
    %v73 = vld [vmem:[#allocation2] ss:$2 sm:$0xff]
    %74 = vxpose.xlu0.b32.start [1/16] %v73, 128
    %75 = vxpose.xlu0.b32.cont [2/16] 0.0, 128
    %76 = vxpose.xlu0.b32.cont [3/16] 0.0, 128
    %77 = vxpose.xlu0.b32.cont [4/16] 0.0, 128
    %78 = vxpose.xlu0.b32.cont [5/16] 0.0, 128
    %79 = vxpose.xlu0.b32.cont [6/16] 0.0, 128
    %80 = vxpose.xlu0.b32.cont [7/16] 0.0, 128
    %81 = vxpose.xlu0.b32.cont [8/16] 0.0, 128
    %82 = vxpose.xlu0.b32.cont [9/16] 0.0, 128
    %83 = vxpose.xlu0.b32.cont [10/16] 0.0, 128
    %84 = vxpose.xlu0.b32.cont [11/16] 0.0, 128
    %85 = vxpose.xlu0.b32.cont [12/16] 0.0, 128
    %86 = vxpose.xlu0.b32.cont [13/16] 0.0, 128
    %87 = vxpose.xlu0.b32.cont [14/16] 0.0, 128
    %88 = vxpose.xlu0.b32.cont [15/16] 0.0, 128
    %89 = vxpose.xlu0.b32.end [16/16] 0.0, 128
    %v90 = vpop.trf.xlu0
    %v91 = vpop.trf.xlu0
    %v92 = vpop.trf.xlu0
    %v93 = vpop.trf.xlu0
    %v94 = vpop.trf.xlu0
    %v95 = vpop.trf.xlu0
    %v96 = vpop.trf.xlu0
    %v97 = vpop.trf.xlu0
    %v98 = vpop.trf.xlu0
    %v99 = vpop.trf.xlu0
    %v100 = vpop.trf.xlu0
    %v101 = vpop.trf.xlu0
    %v102 = vpop.trf.xlu0
    %v103 = vpop.trf.xlu0
    %v104 = vpop.trf.xlu0
    %v105 = vpop.trf.xlu0
    %vm106 = vcmask 64512
    %107 = vst.msk [vmem:[#allocation6] sm:$0xff] %vm106, %v90
    %108 = vst.msk [vmem:[#allocation6 + $0x8] sm:$0xff] %vm106, %v91
    %109 = vst.msk [vmem:[#allocation6 + $0x10] sm:$0xff] %vm106, %v92
    %110 = vst.msk [vmem:[#allocation6 + $0x18] sm:$0xff] %vm106, %v93
    %111 = vst.msk [vmem:[#allocation6 + $0x20] sm:$0xff] %vm106, %v94
    %112 = vst.msk [vmem:[#allocation6 + $0x28] sm:$0xff] %vm106, %v95
    %113 = vst.msk [vmem:[#allocation6 + $0x30] sm:$0xff] %vm106, %v96
    %114 = vst.msk [vmem:[#allocation6 + $0x38] sm:$0xff] %vm106, %v97
    // Predicated region
    $region10: #{tpu_custom_call.1} parent=1 // pred_check
      _
    $region11: #{tpu_custom_call.1} parent=1 // pred_check_branch
      %116 = sbr.rel (0) target = $region13
    $region12: #{tpu_custom_call.1} parent=1 // pred_region
      %s118 = ssub.s32 1024, 1024
      %119 = vsyncadd [#allocation5], %s118
      %s120 = sshll.u32 [#allocation6], 4
      %s121 = int_to_ptr.vmem [resolvable:$true] %s120
      %126 = dma.vmem_to_hbm [thread:$0]  %s121, 1024, %s1, [#allocation5], 128, 128, 8
    $region13: #{tpu_custom_call.1} parent=1 // pred_fallthru
      _
    // Predicated region
    $region14: #{tpu_custom_call.1} parent=1 // pred_check
      _
    $region15: #{tpu_custom_call.1} parent=1 // pred_check_branch
      %128 = sbr.rel (0) target = $region17
    $region16: #{tpu_custom_call.1} parent=1 // pred_region
      %129 = dma.done [#allocation5], 1024
    $region17: #{tpu_custom_call.1} parent=1 // pred_fallthru
      _
    %130 = vsyncpa [#allocation4], 1
    %131 = vsyncpa [#allocation5], 1

</llo_original>
